<compile_context>
chip_gen: v5e
topology: v5e:2x2
jax: 0.10.0
libtpu: 0.0.40
codegen_flags: <defaults>
</compile_context>

<pallas_src>
import jax
import jax.numpy as jnp
from jax.experimental import pallas as pl
from jax.experimental.pallas import tpu as pltpu

IN_FEATURES = 28 * 28          # 784
OUT_FEATURES = 10
TM_MAX = 2048                  # batch rows per grid step
VMEM_LIMIT_BYTES = 32 << 20    # covers 2x(2048x896x4) x-bufs + out bufs + weight


def _linear_kernel(x_ref, wt_ref, b_ref, o_ref):
    # x_ref:  (TM, 784)   input dtype (cast to f32 in-kernel)
    # wt_ref: (784, 10)   f32 (transposed weight, resident)
    # b_ref:  (1, 10)     f32 (resident)
    # o_ref:  (TM, 10)    f32
    x = x_ref[...].astype(jnp.float32)
    acc = jnp.dot(x, wt_ref[...], preferred_element_type=jnp.float32)
    o_ref[...] = acc + b_ref[...]


def prepare_params(weight, bias):
    """One-time parameter prep (hoisted out of the per-call path).

    weight: (10, 784), bias: (10,)  — as in nn.Linear(784, 10).
    Returns transposed (784, 10) weight and (1, 10) bias, both f32.
    """
    wt = weight.astype(jnp.float32).T                     # (784, 10)
    b2 = bias.astype(jnp.float32).reshape(1, OUT_FEATURES)  # (1, 10)
    return wt, b2


def _round_up(a, m):
    return ((a + m - 1) // m) * m


def net_forward(x, wt, b2):
    """x: (B, 1, 28, 28) (or anything flattening to (B, 784)), any dtype.
    wt/b2: outputs of prepare_params().
    Returns (B, 10) f32 logits."""
    xf = x.reshape(-1, IN_FEATURES)   # stream native dtype; cast inside kernel
    B = xf.shape[0]

    # Tile size: 8-aligned, <= TM_MAX, and aim for >= 2 grid steps when the
    # batch allows (keeps both v7x TensorCores busy; no-op on v5e/v6e).
    b8 = _round_up(B, 8)
    if b8 <= 2 * TM_MAX:
        tm = min(TM_MAX, max(8, _round_up(-(-b8 // 2), 8)))
    else:
        tm = TM_MAX
    grid = (pl.cdiv(B, tm),)

    cost = pl.CostEstimate(
        flops=2 * B * IN_FEATURES * OUT_FEATURES,
        transcendentals=0,
        bytes_accessed=int(
            B * IN_FEATURES * xf.dtype.itemsize            # x read
            + IN_FEATURES * OUT_FEATURES * 4               # weight read
            + OUT_FEATURES * 4                             # bias read
            + B * OUT_FEATURES * 4                         # output write
        ),
    )

    out = pl.pallas_call(
        _linear_kernel,
        out_shape=jax.ShapeDtypeStruct((B, OUT_FEATURES), jnp.float32),
        grid_spec=pltpu.PrefetchScalarGridSpec(
            num_scalar_prefetch=0,
            grid=grid,
            in_specs=[
                # x tile streams along the batch axis (partial last block OK).
                pl.BlockSpec((tm, IN_FEATURES), lambda i: (i, 0)),
                # Weight & bias: small, resident (constant block index).
                pl.BlockSpec((IN_FEATURES, OUT_FEATURES), lambda i: (0, 0)),
                pl.BlockSpec((1, OUT_FEATURES), lambda i: (0, 0)),
            ],
            out_specs=pl.BlockSpec((tm, OUT_FEATURES), lambda i: (i, 0)),
        ),
        compiler_params=pltpu.CompilerParams(
            dimension_semantics=("parallel",),
            vmem_limit_bytes=VMEM_LIMIT_BYTES,
        ),
        cost_estimate=cost,
    )(xf, wt, b2)

    return out


if __name__ == "__main__":
    key = jax.random.PRNGKey(0)
    kx, kw, kb = jax.random.split(key, 3)

    # Deterministic synthetic parameters (shapes from nn.Linear(784, 10)).
    weight = jax.random.normal(kw, (OUT_FEATURES, IN_FEATURES), dtype=jnp.float32) * 0.02
    bias = jax.random.normal(kb, (OUT_FEATURES,), dtype=jnp.float32) * 0.02

    # Small example input consistent with the forward: batch=2, 1x28x28.
    x = jax.random.normal(kx, (2, 1, 28, 28), dtype=jnp.float32)

    # One-time parameter prep, then the kernel forward.
    wt_p, b_p = prepare_params(weight, bias)
    out = net_forward(x, wt_p, b_p)
    out = jax.block_until_ready(out)

    # Sanity check against plain-JAX reference.
    ref = x.reshape(-1, IN_FEATURES) @ weight.T + bias
    assert out.shape == (2, OUT_FEATURES)
    assert jnp.allclose(out, ref, atol=1e-5, rtol=1e-5)

    print("KERNEL_OK")
</pallas_src>

<mosaic_0001>
module attributes {stable_mosaic.version = 11 : i64} {
  func.func @_linear_kernel(%arg0: i32, %arg1: memref<8x784xf32, #tpu.memory_space<vmem>>, %arg2: memref<784x10xf32, #tpu.memory_space<vmem>>, %arg3: memref<1x10xf32, #tpu.memory_space<vmem>>, %arg4: memref<8x10xf32, #tpu.memory_space<vmem>>) attributes {dimension_semantics = [#tpu.dimension_semantics<parallel>], iteration_bounds = array<i64: 1>, scalar_prefetch = 0 : i64, scratch_operands = 0 : i64, tpu.core_type = #tpu.core_type<tc>, window_params = [{transform_indices = @transform_0, window_bounds = array<i64: 8, 784>}, {pipeline_mode = #tpu.pipeline_mode<synchronous>, transform_indices = @transform_1, window_bounds = array<i64: 784, 10>}, {pipeline_mode = #tpu.pipeline_mode<synchronous>, transform_indices = @transform_2, window_bounds = array<i64: 1, 10>}, {transform_indices = @transform_3, window_bounds = array<i64: 8, 10>}]} {
    %c0 = arith.constant 0 : index
    %c0_0 = arith.constant 0 : index
    %0 = vector.load %arg1[%c0, %c0_0] : memref<8x784xf32, #tpu.memory_space<vmem>>, vector<8x784xf32>
    %c0_1 = arith.constant 0 : index
    %c0_2 = arith.constant 0 : index
    %1 = vector.load %arg2[%c0_1, %c0_2] : memref<784x10xf32, #tpu.memory_space<vmem>>, vector<784x10xf32>
    %cst = arith.constant dense<0.000000e+00> : vector<8x10xf32>
    %2 = tpu.matmul %0, %1, %cst {dimension_numbers = #tpu.dot_dimension_numbers<[1], [0], [0], [1], [0, 0, 1, 1], [], []>} : vector<8x784xf32>, vector<784x10xf32>, vector<8x10xf32> -> vector<8x10xf32>
    %c0_3 = arith.constant 0 : index
    %c0_4 = arith.constant 0 : index
    %3 = vector.load %arg3[%c0_3, %c0_4] : memref<1x10xf32, #tpu.memory_space<vmem>>, vector<1x10xf32>
    %4 = vector.broadcast %3 : vector<1x10xf32> to vector<8x10xf32>
    %5 = arith.addf %2, %4 : vector<8x10xf32>
    %c0_5 = arith.constant 0 : index
    %c0_6 = arith.constant 0 : index
    %6 = vector.load %arg4[%c0_5, %c0_6] : memref<8x10xf32, #tpu.memory_space<vmem>>, vector<8x10xf32>
    tpu.vector_store %arg4[%c0_5, %c0_6], %5 {strides = array<i32>} : memref<8x10xf32, #tpu.memory_space<vmem>>, vector<8x10xf32>,
    return
  }
  func.func @transform_0(%arg0: i32) -> (i32, i32) {
    %c0_i32 = arith.constant 0 : i32
    %c0_i32_0 = arith.constant 0 : i32
    return %arg0, %c0_i32 : i32, i32
  }
  func.func @transform_1(%arg0: i32) -> (i32, i32) {
    %c0_i32 = arith.constant 0 : i32
    %c0_i32_0 = arith.constant 0 : i32
    %c0_i32_1 = arith.constant 0 : i32
    return %c0_i32, %c0_i32_0 : i32, i32
  }
  func.func @transform_2(%arg0: i32) -> (i32, i32) {
    %c0_i32 = arith.constant 0 : i32
    %c0_i32_0 = arith.constant 0 : i32
    %c0_i32_1 = arith.constant 0 : i32
    return %c0_i32, %c0_i32_0 : i32, i32
  }
  func.func @transform_3(%arg0: i32) -> (i32, i32) {
    %c0_i32 = arith.constant 0 : i32
    %c0_i32_0 = arith.constant 0 : i32
    return %arg0, %c0_i32 : i32, i32
  }
}

</mosaic_0001>

<llo_original>
// kernel: tpu_custom_call.1
$region0: #{tpu_custom_call.1}
  #allocation0 [shape = 'u32[]', space=smem, size = 0x4, offset = 0x4, fixed_abs, tag = 'smem constant byte address 0x4 - core index']
  #allocation1 [shape = 'u32[72,128]{1,0:T(1,128)}', space=vmem, size = 0x9000, scoped, tag = 'internal scratch']
  %s0 = inlined_call_operand.vmem [shape: f32[2,784], index: 0, kind: input, shape index: {}]
  %s1 = inlined_call_operand.vmem [shape: f32[784,10], index: 1, kind: input, shape index: {}]
  %s2 = inlined_call_operand.vmem [shape: f32[1,10], index: 2, kind: input, shape index: {}]
  %s3 = inlined_call_operand.hbm [shape: f32[2,10], index: 3, kind: output, shape index: {}]
  %s4 = sld [smem:[#allocation0]]
  $region22: #{tpu_custom_call.1} parent=0
    _
  %s6 = ssub.s32 1, %s4
  %s7 = scalar_select 0, %s6, %s4
  $region1: #{tpu_custom_call.1} parent=0
    #allocation2 [shape = 'u8[4096]{0}', space=vmem, size = 0x1000, scoped, tag = 'output window, operand 0, single buffered']
    #allocation3 [shape = 's32[1]{0}', space=sflag, size = 0x4, scoped, tag = 'scoped memory for tpu_custom_call.1']
    %8 = vsyncpa [#allocation3], 0
    // Predicated region
    $region2: #{tpu_custom_call.1} parent=1 // pred_check
      _
    $region3: #{tpu_custom_call.1} parent=1 // pred_check_branch
      %10 = sbr.rel (0) target = $region5
    $region4: #{tpu_custom_call.1} parent=1 // pred_region
      _
    $region5: #{tpu_custom_call.1} parent=1 // pred_fallthru
      _
    // Predicated region
    $region6: #{tpu_custom_call.1} parent=1 // pred_check
      _
    $region7: #{tpu_custom_call.1} parent=1 // pred_check_branch
      %12 = sbr.rel (0) target = $region9
    $region8: #{tpu_custom_call.1} parent=1 // pred_region
      _
    $region9: #{tpu_custom_call.1} parent=1 // pred_fallthru
      _
    // Predicated region
    $region10: #{tpu_custom_call.1} parent=1 // pred_check
      _
    $region11: #{tpu_custom_call.1} parent=1 // pred_check_branch
      %14 = sbr.rel (0) target = $region13
    $region12: #{tpu_custom_call.1} parent=1 // pred_region
      _
    $region13: #{tpu_custom_call.1} parent=1 // pred_fallthru
      _
    %v15 = vld [vmem:[%s0] sm:$0xff]
    %v16 = vld [vmem:[%s0 + $0x8] sm:$0x3f]
    %v17 = vld [vmem:[%s0 + $0xe] sm:$0xff]
    %v18 = vld [vmem:[%s0 + $0x16] sm:$0x3f]
    %v19 = vld [vmem:[%s0 + $0x1c] sm:$0xff]
    %v20 = vld [vmem:[%s0 + $0x24] sm:$0x3f]
    %v21 = vld [vmem:[%s0 + $0x2a] sm:$0xff]
    %v22 = vld [vmem:[%s0 + $0x32] sm:$0x3f]
    %v23 = vld [vmem:[%s1] sm:$0xff]
    %v24 = vld [vmem:[%s1 + $0x8] sm:$0xff]
    %v25 = vld [vmem:[%s1 + $0x10] sm:$0xff]
    %v26 = vld [vmem:[%s1 + $0x18] sm:$0xff]
    %v27 = vld [vmem:[%s1 + $0x20] sm:$0xff]
    %v28 = vld [vmem:[%s1 + $0x28] sm:$0xff]
    %v29 = vld [vmem:[%s1 + $0x30] sm:$0xff]
    %v30 = vld [vmem:[%s1 + $0x38] sm:$0xff]
    %v31 = vld [vmem:[%s1 + $0x40] sm:$0xff]
    %v32 = vld [vmem:[%s1 + $0x48] sm:$0xff]
    %v33 = vld [vmem:[%s1 + $0x50] sm:$0xff]
    %v34 = vld [vmem:[%s1 + $0x58] sm:$0xff]
    %v35 = vld [vmem:[%s1 + $0x60] sm:$0xff]
    %v36 = vld [vmem:[%s1 + $0x68] sm:$0xff]
    %v37 = vld [vmem:[%s1 + $0x70] sm:$0xff]
    %v38 = vld [vmem:[%s1 + $0x78] sm:$0xff]
    %v39 = vld [vmem:[%s1 + $0x80] sm:$0xff]
    %v40 = vld [vmem:[%s1 + $0x88] sm:$0xff]
    %v41 = vld [vmem:[%s1 + $0x90] sm:$0xff]
    %v42 = vld [vmem:[%s1 + $0x98] sm:$0xff]
    %v43 = vld [vmem:[%s1 + $0xa0] sm:$0xff]
    %v44 = vld [vmem:[%s1 + $0xa8] sm:$0xff]
    %v45 = vld [vmem:[%s1 + $0xb0] sm:$0xff]
    %v46 = vld [vmem:[%s1 + $0xb8] sm:$0xff]
    %v47 = vld [vmem:[%s1 + $0xc0] sm:$0xff]
    %v48 = vld [vmem:[%s1 + $0xc8] sm:$0xff]
    %v49 = vld [vmem:[%s1 + $0xd0] sm:$0xff]
    %v50 = vld [vmem:[%s1 + $0xd8] sm:$0xff]
    %v51 = vld [vmem:[%s1 + $0xe0] sm:$0xff]
    %v52 = vld [vmem:[%s1 + $0xe8] sm:$0xff]
    %v53 = vld [vmem:[%s1 + $0xf0] sm:$0xff]
    %v54 = vld [vmem:[%s1 + $0xf8] sm:$0xff]
    %v55 = vld [vmem:[%s1 + $0x100] sm:$0xff]
    %v56 = vld [vmem:[%s1 + $0x108] sm:$0xff]
    %v57 = vld [vmem:[%s1 + $0x110] sm:$0xff]
    %v58 = vld [vmem:[%s1 + $0x118] sm:$0xff]
    %v59 = vld [vmem:[%s1 + $0x120] sm:$0xff]
    %v60 = vld [vmem:[%s1 + $0x128] sm:$0xff]
    %v61 = vld [vmem:[%s1 + $0x130] sm:$0xff]
    %v62 = vld [vmem:[%s1 + $0x138] sm:$0xff]
    %v63 = vld [vmem:[%s1 + $0x140] sm:$0xff]
    %v64 = vld [vmem:[%s1 + $0x148] sm:$0xff]
    %v65 = vld [vmem:[%s1 + $0x150] sm:$0xff]
    %v66 = vld [vmem:[%s1 + $0x158] sm:$0xff]
    %v67 = vld [vmem:[%s1 + $0x160] sm:$0xff]
    %v68 = vld [vmem:[%s1 + $0x168] sm:$0xff]
    %v69 = vld [vmem:[%s1 + $0x170] sm:$0xff]
    %v70 = vld [vmem:[%s1 + $0x178] sm:$0xff]
    %v71 = vld [vmem:[%s1 + $0x180] sm:$0xff]
    %v72 = vld [vmem:[%s1 + $0x188] sm:$0xff]
    %v73 = vld [vmem:[%s1 + $0x190] sm:$0xff]
    %v74 = vld [vmem:[%s1 + $0x198] sm:$0xff]
    %v75 = vld [vmem:[%s1 + $0x1a0] sm:$0xff]
    %v76 = vld [vmem:[%s1 + $0x1a8] sm:$0xff]
    %v77 = vld [vmem:[%s1 + $0x1b0] sm:$0xff]
    %v78 = vld [vmem:[%s1 + $0x1b8] sm:$0xff]
    %v79 = vld [vmem:[%s1 + $0x1c0] sm:$0xff]
    %v80 = vld [vmem:[%s1 + $0x1c8] sm:$0xff]
    %v81 = vld [vmem:[%s1 + $0x1d0] sm:$0xff]
    %v82 = vld [vmem:[%s1 + $0x1d8] sm:$0xff]
    %v83 = vld [vmem:[%s1 + $0x1e0] sm:$0xff]
    %v84 = vld [vmem:[%s1 + $0x1e8] sm:$0xff]
    %v85 = vld [vmem:[%s1 + $0x1f0] sm:$0xff]
    %v86 = vld [vmem:[%s1 + $0x1f8] sm:$0xff]
    %v87 = vld [vmem:[%s1 + $0x200] sm:$0xff]
    %v88 = vld [vmem:[%s1 + $0x208] sm:$0xff]
    %v89 = vld [vmem:[%s1 + $0x210] sm:$0xff]
    %v90 = vld [vmem:[%s1 + $0x218] sm:$0xff]
    %v91 = vld [vmem:[%s1 + $0x220] sm:$0xff]
    %v92 = vld [vmem:[%s1 + $0x228] sm:$0xff]
    %v93 = vld [vmem:[%s1 + $0x230] sm:$0xff]
    %v94 = vld [vmem:[%s1 + $0x238] sm:$0xff]
    %v95 = vld [vmem:[%s1 + $0x240] sm:$0xff]
    %v96 = vld [vmem:[%s1 + $0x248] sm:$0xff]
    %v97 = vld [vmem:[%s1 + $0x250] sm:$0xff]
    %v98 = vld [vmem:[%s1 + $0x258] sm:$0xff]
    %v99 = vld [vmem:[%s1 + $0x260] sm:$0xff]
    %v100 = vld [vmem:[%s1 + $0x268] sm:$0xff]
    %v101 = vld [vmem:[%s1 + $0x270] sm:$0xff]
    %v102 = vld [vmem:[%s1 + $0x278] sm:$0xff]
    %v103 = vld [vmem:[%s1 + $0x280] sm:$0xff]
    %v104 = vld [vmem:[%s1 + $0x288] sm:$0xff]
    %v105 = vld [vmem:[%s1 + $0x290] sm:$0xff]
    %v106 = vld [vmem:[%s1 + $0x298] sm:$0xff]
    %v107 = vld [vmem:[%s1 + $0x2a0] sm:$0xff]
    %v108 = vld [vmem:[%s1 + $0x2a8] sm:$0xff]
    %v109 = vld [vmem:[%s1 + $0x2b0] sm:$0xff]
    %v110 = vld [vmem:[%s1 + $0x2b8] sm:$0xff]
    %v111 = vld [vmem:[%s1 + $0x2c0] sm:$0xff]
    %v112 = vld [vmem:[%s1 + $0x2c8] sm:$0xff]
    %v113 = vld [vmem:[%s1 + $0x2d0] sm:$0xff]
    %v114 = vld [vmem:[%s1 + $0x2d8] sm:$0xff]
    %v115 = vld [vmem:[%s1 + $0x2e0] sm:$0xff]
    %v116 = vld [vmem:[%s1 + $0x2e8] sm:$0xff]
    %v117 = vld [vmem:[%s1 + $0x2f0] sm:$0xff]
    %v118 = vld [vmem:[%s1 + $0x2f8] sm:$0xff]
    %v119 = vld [vmem:[%s1 + $0x300] sm:$0xff]
    %v120 = vld [vmem:[%s1 + $0x308] sm:$0xff]
    %v121 = vld [vmem:[%s2] sm:$0x1]
    %v123 = vperm.slane %v121, 0
    %133 = vst [vmem:[#allocation1] ss:$4 sm:$0xff] %v15
    %s134 = scalar_lea.vmem [#allocation1], 1
    %135 = vst [vmem:[%s134] ss:$4 sm:$0xff] %v17
    %s136 = scalar_lea.vmem [#allocation1], 2
    %137 = vst [vmem:[%s136] ss:$4 sm:$0xff] %v19
    %s138 = scalar_lea.vmem [#allocation1], 3
    %139 = vst [vmem:[%s138] ss:$4 sm:$0xff] %v21
    %s140 = scalar_lea.vmem [#allocation1], 32
    %141 = vst [vmem:[%s140] ss:$4 sm:$0xff] %v16
    %s142 = scalar_lea.vmem [#allocation1], 33
    %143 = vst [vmem:[%s142] ss:$4 sm:$0xff] %v18
    %s144 = scalar_lea.vmem [#allocation1], 34
    %145 = vst [vmem:[%s144] ss:$4 sm:$0xff] %v20
    %s146 = scalar_lea.vmem [#allocation1], 35
    %147 = vst [vmem:[%s146] ss:$4 sm:$0xff] %v22
    %v148 = vld.sshfl [vmem:[#allocation1] sm:$0xff pattern:$0x73625140]
    %v149 = vld.sshfl [vmem:[#allocation1 + $0x8] sm:$0xff pattern:$0x73625140]
    %v150 = vld.sshfl [vmem:[#allocation1 + $0x10] sm:$0xff pattern:$0x73625140]
    %v151 = vld.sshfl [vmem:[#allocation1 + $0x18] sm:$0xff pattern:$0x73625140]
    %v152 = vld.sshfl [vmem:[#allocation1 + $0x20] sm:$0xff pattern:$0x73625140]
    %v153 = vld.sshfl [vmem:[#allocation1 + $0x28] sm:$0xff pattern:$0x73625140]
    %v154 = vld.sshfl [vmem:[#allocation1 + $0x30] sm:$0xff pattern:$0x73625140]
    %vm161 = vcmask 130048
    %v162 = vsel %vm161, %v154, 0
    %164 = vmatpush.msra.mxu0 %v38
    %165 = vmatpush.msra.mxu0 %v37
    %166 = vmatpush.msra.mxu0 %v36
    %167 = vmatpush.msra.mxu0 %v35
    %168 = vmatpush.msra.mxu0 %v34
    %169 = vmatpush.msra.mxu0 %v33
    %170 = vmatpush.msra.mxu0 %v32
    %171 = vmatpush.msra.mxu0 %v31
    %172 = vmatpush.msra.mxu0 %v30
    %173 = vmatpush.msra.mxu0 %v29
    %174 = vmatpush.msra.mxu0 %v28
    %175 = vmatpush.msra.mxu0 %v27
    %176 = vmatpush.msra.mxu0 %v26
    %177 = vmatpush.msra.mxu0 %v25
    %178 = vmatpush.msra.mxu0 %v24
    %179 = vmatpush.msra.mxu0 %v23
    %180 = vmatmul.f32.gmra.mxu0 %v148
    %v181 = vpop.f32.mrf.mxu0
    %v182 = vadd.f32 %v123, %v181
    %183 = vdwg.mxu0
    %184 = vmatpush.msra.mxu0 %v54
    %185 = vmatpush.msra.mxu0 %v53
    %186 = vmatpush.msra.mxu0 %v52
    %187 = vmatpush.msra.mxu0 %v51
    %188 = vmatpush.msra.mxu0 %v50
    %189 = vmatpush.msra.mxu0 %v49
    %190 = vmatpush.msra.mxu0 %v48
    %191 = vmatpush.msra.mxu0 %v47
    %192 = vmatpush.msra.mxu0 %v46
    %193 = vmatpush.msra.mxu0 %v45
    %194 = vmatpush.msra.mxu0 %v44
    %195 = vmatpush.msra.mxu0 %v43
    %196 = vmatpush.msra.mxu0 %v42
    %197 = vmatpush.msra.mxu0 %v41
    %198 = vmatpush.msra.mxu0 %v40
    %199 = vmatpush.msra.mxu0 %v39
    %200 = vmatmul.f32.gmra.mxu0 %v149
    %v201 = vpop.f32.mrf.mxu0
    %v202 = vadd.f32 %v182, %v201
    %203 = vdwg.mxu0
    %204 = vmatpush.msra.mxu0 %v70
    %205 = vmatpush.msra.mxu0 %v69
    %206 = vmatpush.msra.mxu0 %v68
    %207 = vmatpush.msra.mxu0 %v67
    %208 = vmatpush.msra.mxu0 %v66
    %209 = vmatpush.msra.mxu0 %v65
    %210 = vmatpush.msra.mxu0 %v64
    %211 = vmatpush.msra.mxu0 %v63
    %212 = vmatpush.msra.mxu0 %v62
    %213 = vmatpush.msra.mxu0 %v61
    %214 = vmatpush.msra.mxu0 %v60
    %215 = vmatpush.msra.mxu0 %v59
    %216 = vmatpush.msra.mxu0 %v58
    %217 = vmatpush.msra.mxu0 %v57
    %218 = vmatpush.msra.mxu0 %v56
    %219 = vmatpush.msra.mxu0 %v55
    %220 = vmatmul.f32.gmra.mxu0 %v150
    %v221 = vpop.f32.mrf.mxu0
    %v222 = vadd.f32 %v202, %v221
    %223 = vdwg.mxu0
    %224 = vmatpush.msra.mxu0 %v86
    %225 = vmatpush.msra.mxu0 %v85
    %226 = vmatpush.msra.mxu0 %v84
    %227 = vmatpush.msra.mxu0 %v83
    %228 = vmatpush.msra.mxu0 %v82
    %229 = vmatpush.msra.mxu0 %v81
    %230 = vmatpush.msra.mxu0 %v80
    %231 = vmatpush.msra.mxu0 %v79
    %232 = vmatpush.msra.mxu0 %v78
    %233 = vmatpush.msra.mxu0 %v77
    %234 = vmatpush.msra.mxu0 %v76
    %235 = vmatpush.msra.mxu0 %v75
    %236 = vmatpush.msra.mxu0 %v74
    %237 = vmatpush.msra.mxu0 %v73
    %238 = vmatpush.msra.mxu0 %v72
    %239 = vmatpush.msra.mxu0 %v71
    %240 = vmatmul.f32.gmra.mxu0 %v151
    %v241 = vpop.f32.mrf.mxu0
    %v242 = vadd.f32 %v222, %v241
    %243 = vdwg.mxu0
    %244 = vmatpush.msra.mxu0 %v102
    %245 = vmatpush.msra.mxu0 %v101
    %246 = vmatpush.msra.mxu0 %v100
    %247 = vmatpush.msra.mxu0 %v99
    %248 = vmatpush.msra.mxu0 %v98
    %249 = vmatpush.msra.mxu0 %v97
    %250 = vmatpush.msra.mxu0 %v96
    %251 = vmatpush.msra.mxu0 %v95
    %252 = vmatpush.msra.mxu0 %v94
    %253 = vmatpush.msra.mxu0 %v93
    %254 = vmatpush.msra.mxu0 %v92
    %255 = vmatpush.msra.mxu0 %v91
    %256 = vmatpush.msra.mxu0 %v90
    %257 = vmatpush.msra.mxu0 %v89
    %258 = vmatpush.msra.mxu0 %v88
    %259 = vmatpush.msra.mxu0 %v87
    %260 = vmatmul.f32.gmra.mxu0 %v152
    %v261 = vpop.f32.mrf.mxu0
    %v262 = vadd.f32 %v242, %v261
    %263 = vdwg.mxu0
    %264 = vmatpush.msra.mxu0 %v118
    %265 = vmatpush.msra.mxu0 %v117
    %266 = vmatpush.msra.mxu0 %v116
    %267 = vmatpush.msra.mxu0 %v115
    %268 = vmatpush.msra.mxu0 %v114
    %269 = vmatpush.msra.mxu0 %v113
    %270 = vmatpush.msra.mxu0 %v112
    %271 = vmatpush.msra.mxu0 %v111
    %272 = vmatpush.msra.mxu0 %v110
    %273 = vmatpush.msra.mxu0 %v109
    %274 = vmatpush.msra.mxu0 %v108
    %275 = vmatpush.msra.mxu0 %v107
    %276 = vmatpush.msra.mxu0 %v106
    %277 = vmatpush.msra.mxu0 %v105
    %278 = vmatpush.msra.mxu0 %v104
    %279 = vmatpush.msra.mxu0 %v103
    %280 = vmatmul.f32.gmra.mxu0 %v153
    %v281 = vpop.f32.mrf.mxu0
    %v282 = vadd.f32 %v262, %v281
    %283 = vdwg.mxu0
    %284 = vmatpush.msra.mxu0 0.0
    %285 = vmatpush.msra.mxu0 0.0
    %286 = vmatpush.msra.mxu0 0.0
    %287 = vmatpush.msra.mxu0 0.0
    %288 = vmatpush.msra.mxu0 0.0
    %289 = vmatpush.msra.mxu0 0.0
    %290 = vmatpush.msra.mxu0 0.0
    %291 = vmatpush.msra.mxu0 0.0
    %292 = vmatpush.msra.mxu0 0.0
    %293 = vmatpush.msra.mxu0 0.0
    %294 = vmatpush.msra.mxu0 0.0
    %295 = vmatpush.msra.mxu0 0.0
    %296 = vmatpush.msra.mxu0 0.0
    %297 = vmatpush.msra.mxu0 0.0
    %298 = vmatpush.msra.mxu0 %v120
    %299 = vmatpush.msra.mxu0 %v119
    %300 = vmatmul.f32.gmra.mxu0 %v162
    %v301 = vpop.f32.mrf.mxu0
    %v302 = vadd.f32 %v282, %v301
    %303 = vdwg.mxu0
    %vm304 = vcmask 80896
    %305 = vst.msk [vmem:[#allocation2] sm:$0xff] %vm304, %v302
    // Predicated region
    $region14: #{tpu_custom_call.1} parent=1 // pred_check
      _
    $region15: #{tpu_custom_call.1} parent=1 // pred_check_branch
      %307 = sbr.rel (0) target = $region17
    $region16: #{tpu_custom_call.1} parent=1 // pred_region
      %309 = vsyncadd [#allocation3], 96
      %s310 = sshll.u32 [#allocation2], 4
      %s311 = int_to_ptr.vmem [resolvable:$true] %s310
      %s312 = sshll.u32 %s3, 4
      %s313 = int_to_ptr.hbm [resolvable:$true] %s312
      %318 = dma.vmem_to_hbm [thread:$0]  %s311, 32, %s313, [#allocation3], 32, 32, 2
    $region17: #{tpu_custom_call.1} parent=1 // pred_fallthru
      _
    // Predicated region
    $region18: #{tpu_custom_call.1} parent=1 // pred_check
      _
    $region19: #{tpu_custom_call.1} parent=1 // pred_check_branch
      %320 = sbr.rel (0) target = $region21
    $region20: #{tpu_custom_call.1} parent=1 // pred_region
      %322 = dma.done [#allocation3], 128
    $region21: #{tpu_custom_call.1} parent=1 // pred_fallthru
      _
    %323 = vsyncpa [#allocation3], 1

</llo_original>
